<compile_context>
chip_gen: v7x
topology: tpu7x:2x2x1
jax: 0.10.0
libtpu: 0.0.40
codegen_flags: <defaults>
</compile_context>

<pallas_src>
from types import SimpleNamespace

import numpy as np
import jax
import jax.numpy as jnp
from jax.experimental import pallas as pl
from jax.experimental.pallas import tpu as pltpu

NEG_SLOPE = 0.01   # F.leaky_relu default negative_slope
BN_EPS = 1e-5      # nn.BatchNorm1d default eps


def _leaky(x):
    return jnp.where(x >= 0.0, x, NEG_SLOPE * x)


# ----------------------------------------------------------------------------
# Fused kernel: MLP (BN folded) -> heads matmul -> Lorentz oscillator spectra
# ----------------------------------------------------------------------------
def _make_forward_kernel(n_layers, num_osc, B, S):
    O = num_osc

    def kernel(*refs):
        # refs: g, (W', b') * n_layers, W_heads, b_heads, w, out
        g_ref = refs[0]
        idx = 1

        # ---- MLP: leaky_relu(bn(fc(x))), BN folded into W'/b' at trace time
        x = g_ref[...]
        for _ in range(n_layers):
            W = refs[idx][...]
            b = refs[idx + 1][...]
            idx += 2
            x = _leaky(jnp.dot(x, W, preferred_element_type=jnp.float32) + b)

        Wh = refs[idx][...]
        bh = refs[idx + 1][...]
        w_ref = refs[idx + 2]
        out_ref = refs[idx + 3]

        # ---- all 8 Lorentz-parameter heads as one fused matmul
        #      columns: [e_w0 | e_wp | e_g | m_w0 | m_wp | m_g | e_inf | m_inf]
        xh = _leaky(x)                                         # F.leaky_relu(out)
        heads = _leaky(jnp.dot(xh, Wh, preferred_element_type=jnp.float32) + bh)

        e_w0 = heads[:, 0 * O:1 * O]
        e_wp = heads[:, 1 * O:2 * O]
        e_g = heads[:, 2 * O:3 * O]
        m_w0 = heads[:, 3 * O:4 * O]
        m_wp = heads[:, 4 * O:5 * O]
        m_g = heads[:, 5 * O:6 * O]
        e_inf = heads[:, 6 * O:6 * O + 1]                      # (B, 1)
        m_inf = heads[:, 6 * O + 1:6 * O + 2]                  # (B, 1)

        w = w_ref[...]                                         # (1, S), lane-dense
        w2 = w * w

        # Lorentzian, summed over oscillators.  O is tiny -> unroll in Python and
        # keep every intermediate a lane-dense (B, S) tile (no 3-D relayouts).
        def osc_sum(w0_all, wp_all, g_all):
            s1 = jnp.zeros((B, S), jnp.float32)
            s2 = jnp.zeros((B, S), jnp.float32)
            for o in range(O):
                w0 = jnp.abs(w0_all[:, o:o + 1])               # (B, 1) -> lanes
                wp = jnp.abs(wp_all[:, o:o + 1])
                g = jnp.abs(g_all[:, o:o + 1])
                a = w0 * w0 - w2                               # (B, S)
                denom = a * a + w2 * (g * g)
                inv = pl.reciprocal(denom)                     # 1 recip, not 2 divs
                wp2 = wp * wp
                s1 = s1 + wp2 * a * inv
                s2 = s2 + wp2 * (w * g) * inv
            return s1, s2

        e1, e2 = osc_sum(e_w0, e_wp, e_g)
        m1, m2 = osc_sum(m_w0, m_wp, m_g)
        e1 = e1 + 1.0 + jnp.abs(e_inf)                         # e1 += 1 + |eps_inf|
        m1 = m1 + 1.0 + jnp.abs(m_inf)                         # mu1 += 1 + |mu_inf|

        # ---- single packed lane/sublane-dense output slab (4*B, S)
        out_ref[0 * B:1 * B, :] = e1
        out_ref[1 * B:2 * B, :] = e2
        out_ref[2 * B:3 * B, :] = m1
        out_ref[3 * B:4 * B, :] = m2

    return kernel


def lorentz_spectra_fused(params, flags, G):
    """Runs the fused Pallas kernel; returns (e1, e2, mu1, mu2), each (B, S) f32."""
    B = G.shape[0]
    S = flags.num_spec_points
    O = flags.num_lorentz_osc
    n_layers = len(params["mlp"])

    args = [G.astype(jnp.float32)]
    # fold BatchNorm (eval, running stats) into the Linear weights at trace time
    for layer in params["mlp"]:
        scale = layer["gamma"] * jax.lax.rsqrt(layer["var"] + BN_EPS)
        Wf = layer["W"] * scale[None, :]
        bf = (layer["b"] - layer["mean"]) * scale + layer["beta"]
        args += [Wf, bf.reshape(1, -1)]
    args += [params["W_heads"], params["b_heads"].reshape(1, -1),
             params["w"].reshape(1, S).astype(jnp.float32)]

    vmem = pl.BlockSpec(memory_space=pltpu.MemorySpace.VMEM)
    packed = pl.pallas_call(
        _make_forward_kernel(n_layers, O, B, S),
        out_shape=jax.ShapeDtypeStruct((4 * B, S), jnp.float32),
        in_specs=[vmem] * len(args),
        out_specs=vmem,
    )(*args)

    e1 = packed[0 * B:1 * B]
    e2 = packed[1 * B:2 * B]
    m1 = packed[2 * B:3 * B]
    m2 = packed[3 * B:4 * B]
    return e1, e2, m1, m2


# ----------------------------------------------------------------------------
# transfer_matrix (complex64, plain JAX — elementwise tail on (B, S))
# ----------------------------------------------------------------------------
def transfer_matrix(n, z, d, f):
    c = 300000000.0
    e0 = 10 ** 7 / (4 * np.pi * c ** 2)
    m0 = 4 * np.pi * 10 ** (-7)
    _z0 = np.sqrt(m0 / e0)          # computed but unused (mirrors reference)
    d = d * 1e-06
    w = 2 * np.pi * f * 1000000000000.0
    _k0 = w / c                     # computed but unused (mirrors reference)
    k = w * n / c
    kd = k * d
    sin_kd = jnp.sin(kd)
    M12_TE = 0.5j * (z - 1.0 / (z + 1e-05)) * sin_kd
    M22_TE = jnp.cos(kd) - 0.5j * (z + 1.0 / (z + 1e-05)) * sin_kd
    r = M12_TE / (M22_TE + 1e-05)
    t = 1.0 / (M22_TE + 1e-05)
    return r, t


# ----------------------------------------------------------------------------
# Full forward pass
# ----------------------------------------------------------------------------
def lorentz_dnn_forward(params, flags, G):
    e1, e2, m1, m2 = lorentz_spectra_fused(params, flags, G)

    # TODO(synk): the complex64 eps/mu -> (r, t) chain (arctan/tan/sqrt/sin/cos on
    # complex values) has no Pallas/Mosaic dtype support; it stays in plain JAX.
    eps = e1.astype(jnp.complex64) + 1j * e2.astype(jnp.complex64)
    mu = m1.astype(jnp.complex64) + 1j * m2.astype(jnp.complex64)

    w = params["w"]
    d_in = G[:, 1]
    gb = flags.geoboundary
    if flags.normalize_input:
        d_in = d_in * 0.5 * (gb[5] - gb[1]) + (gb[5] + gb[1]) * 0.5
    d = d_in[:, None]                       # (B, 1), broadcasts over spec points
    w_2 = w[None, :]                        # (1, S)

    theta = 2.0 * jnp.arctan(0.0033 * np.pi * w_2 * d * jnp.sqrt(eps * mu))
    magic = (0.5 * theta) / jnp.tan(0.5 * theta)
    eps_eff = magic * eps
    mu_eff = magic * mu
    n_eff = jnp.sqrt(eps_eff * mu_eff)
    n = n_eff.real + 1j * jnp.abs(n_eff.imag)
    z_eff = jnp.sqrt(mu_eff / eps_eff)
    z = jnp.abs(z_eff.real) + 1j * z_eff.imag
    r, t = transfer_matrix(n, z, d, w_2)
    return r, t


# ----------------------------------------------------------------------------
# Deterministic synthetic parameter initialization (shapes from __init__)
# ----------------------------------------------------------------------------
def init_params(flags, key):
    keys = iter(jax.random.split(key, 64))
    mlp = []
    for i in range(len(flags.linear) - 1):
        fin, fout = flags.linear[i], flags.linear[i + 1]
        mlp.append(dict(
            W=0.2 * jax.random.normal(next(keys), (fin, fout), jnp.float32),
            b=0.1 * jax.random.normal(next(keys), (fout,), jnp.float32),
            gamma=1.0 + 0.1 * jax.random.normal(next(keys), (fout,), jnp.float32),
            beta=0.1 * jax.random.normal(next(keys), (fout,), jnp.float32),
            mean=0.1 * jax.random.normal(next(keys), (fout,), jnp.float32),
            var=jax.random.uniform(next(keys), (fout,), jnp.float32, 0.5, 1.5),
        ))
    ls = flags.linear[-1]
    O = flags.num_lorentz_osc
    # packed head weights: 6 bias-free heads of width O + eps_inf + mu_inf (with bias)
    W_heads = 0.2 * jax.random.normal(next(keys), (ls, 6 * O + 2), jnp.float32)
    b_heads = jnp.zeros((6 * O + 2,), jnp.float32)
    b_heads = b_heads.at[6 * O:].set(
        0.1 * jax.random.normal(next(keys), (2,), jnp.float32))
    step = (flags.freq_high - flags.freq_low) / flags.num_spec_points
    w = (flags.freq_low + step * jnp.arange(flags.num_spec_points)).astype(jnp.float32)
    return dict(mlp=mlp, W_heads=W_heads, b_heads=b_heads, w=w)


if __name__ == "__main__":
    flags = SimpleNamespace(
        linear=[4, 32, 32],          # geometry dim 4 -> hidden 32 -> layer_size 32
        num_lorentz_osc=4,
        num_spec_points=128,
        freq_low=0.5,
        freq_high=5.0,
        normalize_input=True,
        geoboundary=[-1.0, 5.0, 5.0, -1.0, 1.0, 20.0, 20.0, 1.0],
    )
    key = jax.random.PRNGKey(0)
    kp, kg = jax.random.split(key)
    params = init_params(flags, kp)
    G = jax.random.uniform(kg, (4, flags.linear[0]), jnp.float32, -1.0, 1.0)

    r, t = jax.jit(lambda g: lorentz_dnn_forward(params, flags, g))(G)
    jax.block_until_ready((r, t))
    assert r.shape == (4, flags.num_spec_points) and r.dtype == jnp.complex64
    assert t.shape == (4, flags.num_spec_points) and t.dtype == jnp.complex64
    assert bool(jnp.all(jnp.isfinite(r.real)) & jnp.all(jnp.isfinite(r.imag)))
    assert bool(jnp.all(jnp.isfinite(t.real)) & jnp.all(jnp.isfinite(t.imag)))
    print("KERNEL_OK")
</pallas_src>

<mosaic_0001>
module attributes {stable_mosaic.version = 11 : i64} {
  func.func @kernel(%arg0: memref<4x4xf32, #tpu.memory_space<vmem>>, %arg1: memref<4x32xf32, #tpu.memory_space<vmem>>, %arg2: memref<1x32xf32, #tpu.memory_space<vmem>>, %arg3: memref<32x32xf32, #tpu.memory_space<vmem>>, %arg4: memref<1x32xf32, #tpu.memory_space<vmem>>, %arg5: memref<32x26xf32, #tpu.memory_space<vmem>>, %arg6: memref<1x26xf32, #tpu.memory_space<vmem>>, %arg7: memref<1x128xf32, #tpu.memory_space<vmem>>, %arg8: memref<16x128xf32, #tpu.memory_space<vmem>>) attributes {dimension_semantics = [], scalar_prefetch = 0 : i64, scratch_operands = 0 : i64, tpu.core_type = #tpu.core_type<tc>} {
    %c0 = arith.constant 0 : index
    %c0_0 = arith.constant 0 : index
    %0 = vector.load %arg0[%c0, %c0_0] : memref<4x4xf32, #tpu.memory_space<vmem>>, vector<4x4xf32>
    %c0_1 = arith.constant 0 : index
    %c0_2 = arith.constant 0 : index
    %1 = vector.load %arg1[%c0_1, %c0_2] : memref<4x32xf32, #tpu.memory_space<vmem>>, vector<4x32xf32>
    %c0_3 = arith.constant 0 : index
    %c0_4 = arith.constant 0 : index
    %2 = vector.load %arg2[%c0_3, %c0_4] : memref<1x32xf32, #tpu.memory_space<vmem>>, vector<1x32xf32>
    %cst = arith.constant dense<0.000000e+00> : vector<4x32xf32>
    %3 = tpu.matmul %0, %1, %cst {dimension_numbers = #tpu.dot_dimension_numbers<[1], [0], [0], [1], [0, 0, 1, 1], [], []>} : vector<4x4xf32>, vector<4x32xf32>, vector<4x32xf32> -> vector<4x32xf32>
    %4 = vector.broadcast %2 : vector<1x32xf32> to vector<4x32xf32>
    %5 = arith.addf %3, %4 : vector<4x32xf32>
    %cst_5 = arith.constant 0.000000e+00 : f32
    %6 = vector.broadcast %cst_5 : f32 to vector<4x32xf32>
    %7 = arith.cmpf oge, %5, %6 : vector<4x32xf32>
    %cst_6 = arith.constant 0.00999999977 : f32
    %8 = vector.broadcast %cst_6 : f32 to vector<4x32xf32>
    %9 = arith.mulf %8, %5 : vector<4x32xf32>
    %10 = arith.select %7, %5, %9 : vector<4x32xi1>, vector<4x32xf32>
    %c0_7 = arith.constant 0 : index
    %c0_8 = arith.constant 0 : index
    %11 = vector.load %arg3[%c0_7, %c0_8] : memref<32x32xf32, #tpu.memory_space<vmem>>, vector<32x32xf32>
    %c0_9 = arith.constant 0 : index
    %c0_10 = arith.constant 0 : index
    %12 = vector.load %arg4[%c0_9, %c0_10] : memref<1x32xf32, #tpu.memory_space<vmem>>, vector<1x32xf32>
    %cst_11 = arith.constant dense<0.000000e+00> : vector<4x32xf32>
    %13 = tpu.matmul %10, %11, %cst_11 {dimension_numbers = #tpu.dot_dimension_numbers<[1], [0], [0], [1], [0, 0, 1, 1], [], []>} : vector<4x32xf32>, vector<32x32xf32>, vector<4x32xf32> -> vector<4x32xf32>
    %14 = vector.broadcast %12 : vector<1x32xf32> to vector<4x32xf32>
    %15 = arith.addf %13, %14 : vector<4x32xf32>
    %cst_12 = arith.constant 0.000000e+00 : f32
    %16 = vector.broadcast %cst_12 : f32 to vector<4x32xf32>
    %17 = arith.cmpf oge, %15, %16 : vector<4x32xf32>
    %cst_13 = arith.constant 0.00999999977 : f32
    %18 = vector.broadcast %cst_13 : f32 to vector<4x32xf32>
    %19 = arith.mulf %18, %15 : vector<4x32xf32>
    %20 = arith.select %17, %15, %19 : vector<4x32xi1>, vector<4x32xf32>
    %c0_14 = arith.constant 0 : index
    %c0_15 = arith.constant 0 : index
    %21 = vector.load %arg5[%c0_14, %c0_15] : memref<32x26xf32, #tpu.memory_space<vmem>>, vector<32x26xf32>
    %c0_16 = arith.constant 0 : index
    %c0_17 = arith.constant 0 : index
    %22 = vector.load %arg6[%c0_16, %c0_17] : memref<1x26xf32, #tpu.memory_space<vmem>>, vector<1x26xf32>
    %cst_18 = arith.constant 0.000000e+00 : f32
    %23 = vector.broadcast %cst_18 : f32 to vector<4x32xf32>
    %24 = arith.cmpf oge, %20, %23 : vector<4x32xf32>
    %cst_19 = arith.constant 0.00999999977 : f32
    %25 = vector.broadcast %cst_19 : f32 to vector<4x32xf32>
    %26 = arith.mulf %25, %20 : vector<4x32xf32>
    %27 = arith.select %24, %20, %26 : vector<4x32xi1>, vector<4x32xf32>
    %cst_20 = arith.constant dense<0.000000e+00> : vector<4x26xf32>
    %28 = tpu.matmul %27, %21, %cst_20 {dimension_numbers = #tpu.dot_dimension_numbers<[1], [0], [0], [1], [0, 0, 1, 1], [], []>} : vector<4x32xf32>, vector<32x26xf32>, vector<4x26xf32> -> vector<4x26xf32>
    %29 = vector.broadcast %22 : vector<1x26xf32> to vector<4x26xf32>
    %30 = arith.addf %28, %29 : vector<4x26xf32>
    %cst_21 = arith.constant 0.000000e+00 : f32
    %31 = vector.broadcast %cst_21 : f32 to vector<4x26xf32>
    %32 = arith.cmpf oge, %30, %31 : vector<4x26xf32>
    %cst_22 = arith.constant 0.00999999977 : f32
    %33 = vector.broadcast %cst_22 : f32 to vector<4x26xf32>
    %34 = arith.mulf %33, %30 : vector<4x26xf32>
    %35 = arith.select %32, %30, %34 : vector<4x26xi1>, vector<4x26xf32>
    %36 = vector.extract_strided_slice %35 {offsets = [0, 0], sizes = [4, 4], strides = [1, 1]} : vector<4x26xf32> to vector<4x4xf32>
    %37 = vector.extract_strided_slice %35 {offsets = [0, 4], sizes = [4, 4], strides = [1, 1]} : vector<4x26xf32> to vector<4x4xf32>
    %38 = vector.extract_strided_slice %35 {offsets = [0, 8], sizes = [4, 4], strides = [1, 1]} : vector<4x26xf32> to vector<4x4xf32>
    %39 = vector.extract_strided_slice %35 {offsets = [0, 12], sizes = [4, 4], strides = [1, 1]} : vector<4x26xf32> to vector<4x4xf32>
    %40 = vector.extract_strided_slice %35 {offsets = [0, 16], sizes = [4, 4], strides = [1, 1]} : vector<4x26xf32> to vector<4x4xf32>
    %41 = vector.extract_strided_slice %35 {offsets = [0, 20], sizes = [4, 4], strides = [1, 1]} : vector<4x26xf32> to vector<4x4xf32>
    %42 = vector.extract_strided_slice %35 {offsets = [0, 24], sizes = [4, 1], strides = [1, 1]} : vector<4x26xf32> to vector<4x1xf32>
    %43 = vector.extract_strided_slice %35 {offsets = [0, 25], sizes = [4, 1], strides = [1, 1]} : vector<4x26xf32> to vector<4x1xf32>
    %c0_23 = arith.constant 0 : index
    %c0_24 = arith.constant 0 : index
    %44 = vector.load %arg7[%c0_23, %c0_24] : memref<1x128xf32, #tpu.memory_space<vmem>>, vector<1x128xf32>
    %45 = arith.mulf %44, %44 : vector<1x128xf32>
    %cst_25 = arith.constant 0.000000e+00 : f32
    %46 = vector.broadcast %cst_25 : f32 to vector<4x128xf32>
    %cst_26 = arith.constant 0.000000e+00 : f32
    %47 = vector.broadcast %cst_26 : f32 to vector<4x128xf32>
    %48 = vector.extract_strided_slice %36 {offsets = [0, 0], sizes = [4, 1], strides = [1, 1]} : vector<4x4xf32> to vector<4x1xf32>
    %49 = math.absf %48 : vector<4x1xf32>
    %50 = vector.extract_strided_slice %37 {offsets = [0, 0], sizes = [4, 1], strides = [1, 1]} : vector<4x4xf32> to vector<4x1xf32>
    %51 = math.absf %50 : vector<4x1xf32>
    %52 = vector.extract_strided_slice %38 {offsets = [0, 0], sizes = [4, 1], strides = [1, 1]} : vector<4x4xf32> to vector<4x1xf32>
    %53 = math.absf %52 : vector<4x1xf32>
    %54 = arith.mulf %49, %49 : vector<4x1xf32>
    %55 = vector.broadcast %54 : vector<4x1xf32> to vector<4x128xf32>
    %56 = vector.broadcast %45 : vector<1x128xf32> to vector<4x128xf32>
    %57 = arith.subf %55, %56 : vector<4x128xf32>
    %58 = arith.mulf %57, %57 : vector<4x128xf32>
    %59 = arith.mulf %53, %53 : vector<4x1xf32>
    %60 = vector.broadcast %45 : vector<1x128xf32> to vector<4x128xf32>
    %61 = vector.broadcast %59 : vector<4x1xf32> to vector<4x128xf32>
    %62 = arith.mulf %60, %61 : vector<4x128xf32>
    %63 = arith.addf %58, %62 : vector<4x128xf32>
    %64 = tpu.reciprocal %63 : vector<4x128xf32> -> vector<4x128xf32>
    %65 = arith.mulf %51, %51 : vector<4x1xf32>
    %66 = vector.broadcast %65 : vector<4x1xf32> to vector<4x128xf32>
    %67 = arith.mulf %66, %57 : vector<4x128xf32>
    %68 = arith.mulf %67, %64 : vector<4x128xf32>
    %69 = arith.addf %46, %68 : vector<4x128xf32>
    %70 = vector.broadcast %44 : vector<1x128xf32> to vector<4x128xf32>
    %71 = vector.broadcast %53 : vector<4x1xf32> to vector<4x128xf32>
    %72 = arith.mulf %70, %71 : vector<4x128xf32>
    %73 = vector.broadcast %65 : vector<4x1xf32> to vector<4x128xf32>
    %74 = arith.mulf %73, %72 : vector<4x128xf32>
    %75 = arith.mulf %74, %64 : vector<4x128xf32>
    %76 = arith.addf %47, %75 : vector<4x128xf32>
    %77 = vector.extract_strided_slice %36 {offsets = [0, 1], sizes = [4, 1], strides = [1, 1]} : vector<4x4xf32> to vector<4x1xf32>
    %78 = math.absf %77 : vector<4x1xf32>
    %79 = vector.extract_strided_slice %37 {offsets = [0, 1], sizes = [4, 1], strides = [1, 1]} : vector<4x4xf32> to vector<4x1xf32>
    %80 = math.absf %79 : vector<4x1xf32>
    %81 = vector.extract_strided_slice %38 {offsets = [0, 1], sizes = [4, 1], strides = [1, 1]} : vector<4x4xf32> to vector<4x1xf32>
    %82 = math.absf %81 : vector<4x1xf32>
    %83 = arith.mulf %78, %78 : vector<4x1xf32>
    %84 = vector.broadcast %83 : vector<4x1xf32> to vector<4x128xf32>
    %85 = vector.broadcast %45 : vector<1x128xf32> to vector<4x128xf32>
    %86 = arith.subf %84, %85 : vector<4x128xf32>
    %87 = arith.mulf %86, %86 : vector<4x128xf32>
    %88 = arith.mulf %82, %82 : vector<4x1xf32>
    %89 = vector.broadcast %45 : vector<1x128xf32> to vector<4x128xf32>
    %90 = vector.broadcast %88 : vector<4x1xf32> to vector<4x128xf32>
    %91 = arith.mulf %89, %90 : vector<4x128xf32>
    %92 = arith.addf %87, %91 : vector<4x128xf32>
    %93 = tpu.reciprocal %92 : vector<4x128xf32> -> vector<4x128xf32>
    %94 = arith.mulf %80, %80 : vector<4x1xf32>
    %95 = vector.broadcast %94 : vector<4x1xf32> to vector<4x128xf32>
    %96 = arith.mulf %95, %86 : vector<4x128xf32>
    %97 = arith.mulf %96, %93 : vector<4x128xf32>
    %98 = arith.addf %69, %97 : vector<4x128xf32>
    %99 = vector.broadcast %44 : vector<1x128xf32> to vector<4x128xf32>
    %100 = vector.broadcast %82 : vector<4x1xf32> to vector<4x128xf32>
    %101 = arith.mulf %99, %100 : vector<4x128xf32>
    %102 = vector.broadcast %94 : vector<4x1xf32> to vector<4x128xf32>
    %103 = arith.mulf %102, %101 : vector<4x128xf32>
    %104 = arith.mulf %103, %93 : vector<4x128xf32>
    %105 = arith.addf %76, %104 : vector<4x128xf32>
    %106 = vector.extract_strided_slice %36 {offsets = [0, 2], sizes = [4, 1], strides = [1, 1]} : vector<4x4xf32> to vector<4x1xf32>
    %107 = math.absf %106 : vector<4x1xf32>
    %108 = vector.extract_strided_slice %37 {offsets = [0, 2], sizes = [4, 1], strides = [1, 1]} : vector<4x4xf32> to vector<4x1xf32>
    %109 = math.absf %108 : vector<4x1xf32>
    %110 = vector.extract_strided_slice %38 {offsets = [0, 2], sizes = [4, 1], strides = [1, 1]} : vector<4x4xf32> to vector<4x1xf32>
    %111 = math.absf %110 : vector<4x1xf32>
    %112 = arith.mulf %107, %107 : vector<4x1xf32>
    %113 = vector.broadcast %112 : vector<4x1xf32> to vector<4x128xf32>
    %114 = vector.broadcast %45 : vector<1x128xf32> to vector<4x128xf32>
    %115 = arith.subf %113, %114 : vector<4x128xf32>
    %116 = arith.mulf %115, %115 : vector<4x128xf32>
    %117 = arith.mulf %111, %111 : vector<4x1xf32>
    %118 = vector.broadcast %45 : vector<1x128xf32> to vector<4x128xf32>
    %119 = vector.broadcast %117 : vector<4x1xf32> to vector<4x128xf32>
    %120 = arith.mulf %118, %119 : vector<4x128xf32>
    %121 = arith.addf %116, %120 : vector<4x128xf32>
    %122 = tpu.reciprocal %121 : vector<4x128xf32> -> vector<4x128xf32>
    %123 = arith.mulf %109, %109 : vector<4x1xf32>
    %124 = vector.broadcast %123 : vector<4x1xf32> to vector<4x128xf32>
    %125 = arith.mulf %124, %115 : vector<4x128xf32>
    %126 = arith.mulf %125, %122 : vector<4x128xf32>
    %127 = arith.addf %98, %126 : vector<4x128xf32>
    %128 = vector.broadcast %44 : vector<1x128xf32> to vector<4x128xf32>
    %129 = vector.broadcast %111 : vector<4x1xf32> to vector<4x128xf32>
    %130 = arith.mulf %128, %129 : vector<4x128xf32>
    %131 = vector.broadcast %123 : vector<4x1xf32> to vector<4x128xf32>
    %132 = arith.mulf %131, %130 : vector<4x128xf32>
    %133 = arith.mulf %132, %122 : vector<4x128xf32>
    %134 = arith.addf %105, %133 : vector<4x128xf32>
    %135 = vector.extract_strided_slice %36 {offsets = [0, 3], sizes = [4, 1], strides = [1, 1]} : vector<4x4xf32> to vector<4x1xf32>
    %136 = math.absf %135 : vector<4x1xf32>
    %137 = vector.extract_strided_slice %37 {offsets = [0, 3], sizes = [4, 1], strides = [1, 1]} : vector<4x4xf32> to vector<4x1xf32>
    %138 = math.absf %137 : vector<4x1xf32>
    %139 = vector.extract_strided_slice %38 {offsets = [0, 3], sizes = [4, 1], strides = [1, 1]} : vector<4x4xf32> to vector<4x1xf32>
    %140 = math.absf %139 : vector<4x1xf32>
    %141 = arith.mulf %136, %136 : vector<4x1xf32>
    %142 = vector.broadcast %141 : vector<4x1xf32> to vector<4x128xf32>
    %143 = vector.broadcast %45 : vector<1x128xf32> to vector<4x128xf32>
    %144 = arith.subf %142, %143 : vector<4x128xf32>
    %145 = arith.mulf %144, %144 : vector<4x128xf32>
    %146 = arith.mulf %140, %140 : vector<4x1xf32>
    %147 = vector.broadcast %45 : vector<1x128xf32> to vector<4x128xf32>
    %148 = vector.broadcast %146 : vector<4x1xf32> to vector<4x128xf32>
    %149 = arith.mulf %147, %148 : vector<4x128xf32>
    %150 = arith.addf %145, %149 : vector<4x128xf32>
    %151 = tpu.reciprocal %150 : vector<4x128xf32> -> vector<4x128xf32>
    %152 = arith.mulf %138, %138 : vector<4x1xf32>
    %153 = vector.broadcast %152 : vector<4x1xf32> to vector<4x128xf32>
    %154 = arith.mulf %153, %144 : vector<4x128xf32>
    %155 = arith.mulf %154, %151 : vector<4x128xf32>
    %156 = arith.addf %127, %155 : vector<4x128xf32>
    %157 = vector.broadcast %44 : vector<1x128xf32> to vector<4x128xf32>
    %158 = vector.broadcast %140 : vector<4x1xf32> to vector<4x128xf32>
    %159 = arith.mulf %157, %158 : vector<4x128xf32>
    %160 = vector.broadcast %152 : vector<4x1xf32> to vector<4x128xf32>
    %161 = arith.mulf %160, %159 : vector<4x128xf32>
    %162 = arith.mulf %161, %151 : vector<4x128xf32>
    %163 = arith.addf %134, %162 : vector<4x128xf32>
    %cst_27 = arith.constant 0.000000e+00 : f32
    %164 = vector.broadcast %cst_27 : f32 to vector<4x128xf32>
    %cst_28 = arith.constant 0.000000e+00 : f32
    %165 = vector.broadcast %cst_28 : f32 to vector<4x128xf32>
    %166 = vector.extract_strided_slice %39 {offsets = [0, 0], sizes = [4, 1], strides = [1, 1]} : vector<4x4xf32> to vector<4x1xf32>
    %167 = math.absf %166 : vector<4x1xf32>
    %168 = vector.extract_strided_slice %40 {offsets = [0, 0], sizes = [4, 1], strides = [1, 1]} : vector<4x4xf32> to vector<4x1xf32>
    %169 = math.absf %168 : vector<4x1xf32>
    %170 = vector.extract_strided_slice %41 {offsets = [0, 0], sizes = [4, 1], strides = [1, 1]} : vector<4x4xf32> to vector<4x1xf32>
    %171 = math.absf %170 : vector<4x1xf32>
    %172 = arith.mulf %167, %167 : vector<4x1xf32>
    %173 = vector.broadcast %172 : vector<4x1xf32> to vector<4x128xf32>
    %174 = vector.broadcast %45 : vector<1x128xf32> to vector<4x128xf32>
    %175 = arith.subf %173, %174 : vector<4x128xf32>
    %176 = arith.mulf %175, %175 : vector<4x128xf32>
    %177 = arith.mulf %171, %171 : vector<4x1xf32>
    %178 = vector.broadcast %45 : vector<1x128xf32> to vector<4x128xf32>
    %179 = vector.broadcast %177 : vector<4x1xf32> to vector<4x128xf32>
    %180 = arith.mulf %178, %179 : vector<4x128xf32>
    %181 = arith.addf %176, %180 : vector<4x128xf32>
    %182 = tpu.reciprocal %181 : vector<4x128xf32> -> vector<4x128xf32>
    %183 = arith.mulf %169, %169 : vector<4x1xf32>
    %184 = vector.broadcast %183 : vector<4x1xf32> to vector<4x128xf32>
    %185 = arith.mulf %184, %175 : vector<4x128xf32>
    %186 = arith.mulf %185, %182 : vector<4x128xf32>
    %187 = arith.addf %164, %186 : vector<4x128xf32>
    %188 = vector.broadcast %44 : vector<1x128xf32> to vector<4x128xf32>
    %189 = vector.broadcast %171 : vector<4x1xf32> to vector<4x128xf32>
    %190 = arith.mulf %188, %189 : vector<4x128xf32>
    %191 = vector.broadcast %183 : vector<4x1xf32> to vector<4x128xf32>
    %192 = arith.mulf %191, %190 : vector<4x128xf32>
    %193 = arith.mulf %192, %182 : vector<4x128xf32>
    %194 = arith.addf %165, %193 : vector<4x128xf32>
    %195 = vector.extract_strided_slice %39 {offsets = [0, 1], sizes = [4, 1], strides = [1, 1]} : vector<4x4xf32> to vector<4x1xf32>
    %196 = math.absf %195 : vector<4x1xf32>
    %197 = vector.extract_strided_slice %40 {offsets = [0, 1], sizes = [4, 1], strides = [1, 1]} : vector<4x4xf32> to vector<4x1xf32>
    %198 = math.absf %197 : vector<4x1xf32>
    %199 = vector.extract_strided_slice %41 {offsets = [0, 1], sizes = [4, 1], strides = [1, 1]} : vector<4x4xf32> to vector<4x1xf32>
    %200 = math.absf %199 : vector<4x1xf32>
    %201 = arith.mulf %196, %196 : vector<4x1xf32>
    %202 = vector.broadcast %201 : vector<4x1xf32> to vector<4x128xf32>
    %203 = vector.broadcast %45 : vector<1x128xf32> to vector<4x128xf32>
    %204 = arith.subf %202, %203 : vector<4x128xf32>
    %205 = arith.mulf %204, %204 : vector<4x128xf32>
    %206 = arith.mulf %200, %200 : vector<4x1xf32>
    %207 = vector.broadcast %45 : vector<1x128xf32> to vector<4x128xf32>
    %208 = vector.broadcast %206 : vector<4x1xf32> to vector<4x128xf32>
    %209 = arith.mulf %207, %208 : vector<4x128xf32>
    %210 = arith.addf %205, %209 : vector<4x128xf32>
    %211 = tpu.reciprocal %210 : vector<4x128xf32> -> vector<4x128xf32>
    %212 = arith.mulf %198, %198 : vector<4x1xf32>
    %213 = vector.broadcast %212 : vector<4x1xf32> to vector<4x128xf32>
    %214 = arith.mulf %213, %204 : vector<4x128xf32>
    %215 = arith.mulf %214, %211 : vector<4x128xf32>
    %216 = arith.addf %187, %215 : vector<4x128xf32>
    %217 = vector.broadcast %44 : vector<1x128xf32> to vector<4x128xf32>
    %218 = vector.broadcast %200 : vector<4x1xf32> to vector<4x128xf32>
    %219 = arith.mulf %217, %218 : vector<4x128xf32>
    %220 = vector.broadcast %212 : vector<4x1xf32> to vector<4x128xf32>
    %221 = arith.mulf %220, %219 : vector<4x128xf32>
    %222 = arith.mulf %221, %211 : vector<4x128xf32>
    %223 = arith.addf %194, %222 : vector<4x128xf32>
    %224 = vector.extract_strided_slice %39 {offsets = [0, 2], sizes = [4, 1], strides = [1, 1]} : vector<4x4xf32> to vector<4x1xf32>
    %225 = math.absf %224 : vector<4x1xf32>
    %226 = vector.extract_strided_slice %40 {offsets = [0, 2], sizes = [4, 1], strides = [1, 1]} : vector<4x4xf32> to vector<4x1xf32>
    %227 = math.absf %226 : vector<4x1xf32>
    %228 = vector.extract_strided_slice %41 {offsets = [0, 2], sizes = [4, 1], strides = [1, 1]} : vector<4x4xf32> to vector<4x1xf32>
    %229 = math.absf %228 : vector<4x1xf32>
    %230 = arith.mulf %225, %225 : vector<4x1xf32>
    %231 = vector.broadcast %230 : vector<4x1xf32> to vector<4x128xf32>
    %232 = vector.broadcast %45 : vector<1x128xf32> to vector<4x128xf32>
    %233 = arith.subf %231, %232 : vector<4x128xf32>
    %234 = arith.mulf %233, %233 : vector<4x128xf32>
    %235 = arith.mulf %229, %229 : vector<4x1xf32>
    %236 = vector.broadcast %45 : vector<1x128xf32> to vector<4x128xf32>
    %237 = vector.broadcast %235 : vector<4x1xf32> to vector<4x128xf32>
    %238 = arith.mulf %236, %237 : vector<4x128xf32>
    %239 = arith.addf %234, %238 : vector<4x128xf32>
    %240 = tpu.reciprocal %239 : vector<4x128xf32> -> vector<4x128xf32>
    %241 = arith.mulf %227, %227 : vector<4x1xf32>
    %242 = vector.broadcast %241 : vector<4x1xf32> to vector<4x128xf32>
    %243 = arith.mulf %242, %233 : vector<4x128xf32>
    %244 = arith.mulf %243, %240 : vector<4x128xf32>
    %245 = arith.addf %216, %244 : vector<4x128xf32>
    %246 = vector.broadcast %44 : vector<1x128xf32> to vector<4x128xf32>
    %247 = vector.broadcast %229 : vector<4x1xf32> to vector<4x128xf32>
    %248 = arith.mulf %246, %247 : vector<4x128xf32>
    %249 = vector.broadcast %241 : vector<4x1xf32> to vector<4x128xf32>
    %250 = arith.mulf %249, %248 : vector<4x128xf32>
    %251 = arith.mulf %250, %240 : vector<4x128xf32>
    %252 = arith.addf %223, %251 : vector<4x128xf32>
    %253 = vector.extract_strided_slice %39 {offsets = [0, 3], sizes = [4, 1], strides = [1, 1]} : vector<4x4xf32> to vector<4x1xf32>
    %254 = math.absf %253 : vector<4x1xf32>
    %255 = vector.extract_strided_slice %40 {offsets = [0, 3], sizes = [4, 1], strides = [1, 1]} : vector<4x4xf32> to vector<4x1xf32>
    %256 = math.absf %255 : vector<4x1xf32>
    %257 = vector.extract_strided_slice %41 {offsets = [0, 3], sizes = [4, 1], strides = [1, 1]} : vector<4x4xf32> to vector<4x1xf32>
    %258 = math.absf %257 : vector<4x1xf32>
    %259 = arith.mulf %254, %254 : vector<4x1xf32>
    %260 = vector.broadcast %259 : vector<4x1xf32> to vector<4x128xf32>
    %261 = vector.broadcast %45 : vector<1x128xf32> to vector<4x128xf32>
    %262 = arith.subf %260, %261 : vector<4x128xf32>
    %263 = arith.mulf %262, %262 : vector<4x128xf32>
    %264 = arith.mulf %258, %258 : vector<4x1xf32>
    %265 = vector.broadcast %45 : vector<1x128xf32> to vector<4x128xf32>
    %266 = vector.broadcast %264 : vector<4x1xf32> to vector<4x128xf32>
    %267 = arith.mulf %265, %266 : vector<4x128xf32>
    %268 = arith.addf %263, %267 : vector<4x128xf32>
    %269 = tpu.reciprocal %268 : vector<4x128xf32> -> vector<4x128xf32>
    %270 = arith.mulf %256, %256 : vector<4x1xf32>
    %271 = vector.broadcast %270 : vector<4x1xf32> to vector<4x128xf32>
    %272 = arith.mulf %271, %262 : vector<4x128xf32>
    %273 = arith.mulf %272, %269 : vector<4x128xf32>
    %274 = arith.addf %245, %273 : vector<4x128xf32>
    %275 = vector.broadcast %44 : vector<1x128xf32> to vector<4x128xf32>
    %276 = vector.broadcast %258 : vector<4x1xf32> to vector<4x128xf32>
    %277 = arith.mulf %275, %276 : vector<4x128xf32>
    %278 = vector.broadcast %270 : vector<4x1xf32> to vector<4x128xf32>
    %279 = arith.mulf %278, %277 : vector<4x128xf32>
    %280 = arith.mulf %279, %269 : vector<4x128xf32>
    %281 = arith.addf %252, %280 : vector<4x128xf32>
    %cst_29 = arith.constant 1.000000e+00 : f32
    %282 = vector.broadcast %cst_29 : f32 to vector<4x128xf32>
    %283 = arith.addf %156, %282 : vector<4x128xf32>
    %284 = math.absf %42 : vector<4x1xf32>
    %285 = vector.broadcast %284 : vector<4x1xf32> to vector<4x128xf32>
    %286 = arith.addf %283, %285 : vector<4x128xf32>
    %cst_30 = arith.constant 1.000000e+00 : f32
    %287 = vector.broadcast %cst_30 : f32 to vector<4x128xf32>
    %288 = arith.addf %274, %287 : vector<4x128xf32>
    %289 = math.absf %43 : vector<4x1xf32>
    %290 = vector.broadcast %289 : vector<4x1xf32> to vector<4x128xf32>
    %291 = arith.addf %288, %290 : vector<4x128xf32>
    %c0_31 = arith.constant 0 : index
    %c0_32 = arith.constant 0 : index
    %292 = vector.load %arg8[%c0_31, %c0_32] : memref<16x128xf32, #tpu.memory_space<vmem>>, vector<4x128xf32>
    tpu.vector_store %arg8[%c0_31, %c0_32], %286 {strides = array<i32>} : memref<16x128xf32, #tpu.memory_space<vmem>>, vector<4x128xf32>,
    %c4 = arith.constant 4 : index
    %c0_33 = arith.constant 0 : index
    %293 = vector.load %arg8[%c4, %c0_33] : memref<16x128xf32, #tpu.memory_space<vmem>>, vector<4x128xf32>
    tpu.vector_store %arg8[%c4, %c0_33], %163 {strides = array<i32>} : memref<16x128xf32, #tpu.memory_space<vmem>>, vector<4x128xf32>,
    %c8 = arith.constant 8 : index
    %c0_34 = arith.constant 0 : index
    %294 = vector.load %arg8[%c8, %c0_34] : memref<16x128xf32, #tpu.memory_space<vmem>>, vector<4x128xf32>
    tpu.vector_store %arg8[%c8, %c0_34], %291 {strides = array<i32>} : memref<16x128xf32, #tpu.memory_space<vmem>>, vector<4x128xf32>,
    %c12 = arith.constant 12 : index
    %c0_35 = arith.constant 0 : index
    %295 = vector.load %arg8[%c12, %c0_35] : memref<16x128xf32, #tpu.memory_space<vmem>>, vector<4x128xf32>
    tpu.vector_store %arg8[%c12, %c0_35], %281 {strides = array<i32>} : memref<16x128xf32, #tpu.memory_space<vmem>>, vector<4x128xf32>,
    return
  }
}

</mosaic_0001>

<llo_original>
// kernel: sin.2
$region0: #{sin.2}
  #allocation0 [shape = 's32[1]{0}', space=sflag, size = 0x4, scoped, tag = 'scoped memory for sin.2']
  %s0 = inlined_call_operand.vmem [shape: f32[4,128], index: 0, kind: input, shape index: {}]
  %s1 = inlined_call_operand.vmem [shape: f32[4,128], index: 1, kind: output, shape index: {}]
  %v2 = vld [vmem:[%s0] sm:$0xf]
  %v3 = vand.u32 2147483647, %v2
  %vm4 = vcmp.le.f32.partialorder %v3, 0.7853982
  %vm5 = vcmp.lt.s32.totalorder %v2, 0
  %v6 = vand.u32 %v2, 2139095040
  %v7 = vshrl.u32 %v6, 23
  %v8 = vsub.s32 %v7, 127
  %v9 = vand.u32 2147483647, %v2
  %v10 = vand.u32 %v9, 8388607
  %v11 = vor.u32 %v10, 8388608
  %v12 = vsub.s32 0, %v11
  %v13 = vadd.s32 %v8, 1
  %vm14 = vcmp.gt.s32.totalorder %v13, 0
  %v15 = vsel %vm14, %v13, 0
  %v16 = vshrl.u32 %v15, 5
  %v17 = vand.u32 %v15, 31
  %v18 = vsub.s32 32, %v17
  %v19 = vshrl.u32 683565275, %v18
  %v20 = vshll.u32 683565275, %v17
  %v21 = vshrl.u32 2475754826, %v18
  %v22 = vor.u32 %v20, %v21
  %v23 = vshll.u32 2475754826, %v17
  %v24 = vshrl.u32 2131351028, %v18
  %v25 = vor.u32 %v23, %v24
  %v26 = vshll.u32 2131351028, %v17
  %v27 = vshrl.u32 2102212464, %v18
  %v28 = vor.u32 %v26, %v27
  %v29 = vshll.u32 2102212464, %v17
  %v30 = vshrl.u32 920167782, %v18
  %v31 = vor.u32 %v29, %v30
  %v32 = vshll.u32 920167782, %v17
  %v33 = vshrl.u32 1326507024, %v18
  %v34 = vor.u32 %v32, %v33
  %vm35 = vcmp.lt.s32.totalorder %v16, 1
  %vm36 = vcmp.lt.s32.totalorder %v16, 2
  %vm37 = vcmp.lt.s32.totalorder %v16, 3
  %vm38 = vcmp.lt.s32.totalorder %v16, 4
  %v39 = vsel %vm35, %v19, %v22
  %v40 = vsel %vm38, %v28, 2102212464
  %v41 = vsel %vm37, %v25, %v40
  %v42 = vsel %vm36, %v39, %v41
  %v43 = vsel %vm35, %v22, %v25
  %v44 = vsel %vm38, %v31, 920167782
  %v45 = vsel %vm37, %v28, %v44
  %v46 = vsel %vm36, %v43, %v45
  %v47 = vsel %vm35, %v25, %v28
  %v48 = vsel %vm38, %v34, 1326507024
  %v49 = vsel %vm37, %v31, %v48
  %v50 = vsel %vm36, %v47, %v49
  %v51 = vshll.u32 %v11, 8
  %v52 = vmul.u32.u64.compose %v51, %v50
  %v53 = vextract.low.u32 %v52
  %v54 = vextract.high.u32 %v52
  %v55 = vmul.u32.u64.compose %v51, %v46
  %v56 = vextract.low.u32 %v55
  %v57 = vextract.high.u32 %v55
  %v58 = vmul.u32 %v51, %v42
  %v59 = vadd.s32 %v54, %v56
  %vm60 = vc.u32 %v54, %v56
  %v61 = vadd.s32 %v57, 1
  %v62 = vsel %vm60, %v61, %v57
  %v63 = vadd.s32 %v58, %v62
  %v64 = vadd.s32 %v63, 536870912
  %v65 = vshrl.u32 %v64, 30
  %v66 = vshll.u32 %v65, 30
  %v67 = vsub.s32 %v63, %v66
  %vm68 = vcmp.lt.s32.totalorder %v67, 0
  %v69 = vsub.s32 0, %v67
  %v70 = vsel %vm68, %v69, %v67
  %v71 = vclz %v70
  %v72 = vsub.s32 %v71, 2
  %vm73 = vcmp.gt.s32.totalorder 0, %v72
  %v74 = vsel %vm73, 0, %v72
  %v75 = vsub.s32 32, %v74
  %v76 = vshll.u32 %v67, %v74
  %v77 = vshrl.u32 %v59, %v75
  %v78 = vor.u32 %v76, %v77
  %v79 = vsub.s32 4294967266, %v74
  %v80 = vadd.s32 %v79, 127
  %v81 = vshll.u32 %v80, 23
  %v82 = vor.u32 4788187, %v81
  %v83 = vand.u32 2147483647, %v82
  %v85 = vcvt.s32.f32 %v78
  %v86 = vmul.f32 %v85, %v83
  %v87 = vxor.u32 %v86, 2147483648
  %v88 = vsel %vm5, %v87, %v86
  %v89 = vsub.s32 4, %v65
  %v90 = vsel %vm5, %v89, %v65
  %v91 = vsel %vm4, %v2, %v88
  %v92 = vsel %vm4, 0, %v90
  %v93 = vcosq.f32.pop %v91
  %v94 = vsinq.f32.pop %v91
  %vm95 = vweird.f32 %v2
  %v96 = vadd.s32 %v92, 3
  %v97 = vand.u32 %v96, 3
  %vm98 = vcmp.lt.s32.totalorder %v97, 2
  %vm99 = vcmp.eq.s32.totalorder %v97, 0
  %v100 = vxor.u32 %v94, 2147483648
  %v101 = vsel %vm99, %v93, %v100
  %vm102 = vcmp.eq.s32.totalorder %v97, 2
  %v103 = vxor.u32 %v93, 2147483648
  %v104 = vsel %vm102, %v103, %v94
  %v105 = vsel %vm98, %v101, %v104
  %v106 = vsel %vm95, nan, %v105
  %107 = vst [vmem:[%s1] sm:$0xf] %v106

// kernel: custom-call
$region0: #{custom-call}
  %s0 = inlined_call_operand.vmem [shape: f32[4,128], index: 0, kind: input, shape index: {}]
  %s1 = inlined_call_operand.vmem [shape: f32[4,128], index: 1, kind: input, shape index: {}]
  %s2 = inlined_call_operand.hbm [shape: c64[4,128], index: 2, kind: output, shape index: {}]
  %s3 = scalar_lea.hbm %s2, 64
  $region1: #{custom-call} parent=0
    #allocation0 [shape = 's32[1]{0}', space=sflag, size = 0x4, scoped, tag = 'scoped memory for custom-call']
    %4 = vsyncpa [#allocation0], 0
    %s5 = sshll.u32 %s0, 4
    %s6 = int_to_ptr.vmem [resolvable:$true] %s5
    %8 = dma.vmem_to_hbm [thread:$0]  %s6, 64, %s2, [#allocation0]
    %9 = dma.done [#allocation0], 64
    %10 = vsyncpa [#allocation0], 1
  $region2: #{custom-call} parent=0
    #allocation1 [shape = 's32[1]{0}', space=sflag, size = 0x4, scoped, tag = 'scoped memory for custom-call']
    %11 = vsyncpa [#allocation1], 0
    %s12 = sshll.u32 %s1, 4
    %s13 = int_to_ptr.vmem [resolvable:$true] %s12
    %15 = dma.vmem_to_hbm [thread:$0]  %s13, 64, %s3, [#allocation1]
    %16 = dma.done [#allocation1], 64
    %17 = vsyncpa [#allocation1], 1

// kernel: _lambda_.1
$region0: #{_lambda_.1}
  #allocation0 [shape = 'u32[]', space=smem, size = 0x4, offset = 0x4, fixed_abs, tag = 'smem constant byte address 0x4 - core index']
  #allocation1 [shape = 'u32[144,128]{1,0:T(1,128)}', space=vmem, size = 0x12000, scoped, tag = 'internal scratch']
  %s0 = inlined_call_operand.vmem [shape: f32[4,4], index: 0, kind: input, shape index: {}]
  %s1 = inlined_call_operand.vmem [shape: f32[4,32], index: 1, kind: input, shape index: {}]
  %s2 = inlined_call_operand.vmem [shape: f32[1,32], index: 2, kind: input, shape index: {}]
  %s3 = inlined_call_operand.vmem [shape: f32[32,32], index: 3, kind: input, shape index: {}]
  %s4 = inlined_call_operand.vmem [shape: f32[1,32], index: 4, kind: input, shape index: {}]
  %s5 = inlined_call_operand.hbm [shape: f32[32,26], index: 5, kind: input, shape index: {}]
  %s6 = inlined_call_operand.vmem [shape: f32[1,26], index: 6, kind: input, shape index: {}]
  %s7 = inlined_call_operand.vmem [shape: f32[1,128], index: 7, kind: input, shape index: {}]
  %s8 = inlined_call_operand.vmem [shape: f32[16,128], index: 8, kind: output, shape index: {}]
  %s9 = sld [smem:[#allocation0]]
  $region46: #{_lambda_.1} parent=0
    _
  %s11 = ssub.s32 1, %s9
  %s12 = scalar_select 0, %s11, %s9
  $region1: #{_lambda_.1} parent=0
    #allocation2 [shape = 'u8[16384]{0}', space=vmem, size = 0x4000, scoped, tag = 'input window, operand 5, single buffered']
    #allocation3 [shape = 's32[1]{0}', space=sflag, size = 0x4, scoped, tag = 'scoped memory for _lambda_.1']
    %13 = vsyncpa [#allocation3], 0
    // Predicated region
    $region2: #{_lambda_.1} parent=1 // pred_check
      _
    $region3: #{_lambda_.1} parent=1 // pred_check_branch
      %15 = sbr.rel (0) target = $region5
    $region4: #{_lambda_.1} parent=1 // pred_region
      _
    $region5: #{_lambda_.1} parent=1 // pred_fallthru
      _
    // Predicated region
    $region6: #{_lambda_.1} parent=1 // pred_check
      _
    $region7: #{_lambda_.1} parent=1 // pred_check_branch
      %17 = sbr.rel (0) target = $region9
    $region8: #{_lambda_.1} parent=1 // pred_region
      _
    $region9: #{_lambda_.1} parent=1 // pred_fallthru
      _
    // Predicated region
    $region10: #{_lambda_.1} parent=1 // pred_check
      _
    $region11: #{_lambda_.1} parent=1 // pred_check_branch
      %19 = sbr.rel (0) target = $region13
    $region12: #{_lambda_.1} parent=1 // pred_region
      _
    $region13: #{_lambda_.1} parent=1 // pred_fallthru
      _
    // Predicated region
    $region14: #{_lambda_.1} parent=1 // pred_check
      _
    $region15: #{_lambda_.1} parent=1 // pred_check_branch
      %21 = sbr.rel (0) target = $region17
    $region16: #{_lambda_.1} parent=1 // pred_region
      _
    $region17: #{_lambda_.1} parent=1 // pred_fallthru
      _
    // Predicated region
    $region18: #{_lambda_.1} parent=1 // pred_check
      _
    $region19: #{_lambda_.1} parent=1 // pred_check_branch
      %23 = sbr.rel (0) target = $region21
    $region20: #{_lambda_.1} parent=1 // pred_region
      _
    $region21: #{_lambda_.1} parent=1 // pred_fallthru
      _
    // Predicated region
    $region22: #{_lambda_.1} parent=1 // pred_check
      _
    $region23: #{_lambda_.1} parent=1 // pred_check_branch
      %25 = sbr.rel (0) target = $region25
    $region24: #{_lambda_.1} parent=1 // pred_region
      %s27 = ssub.s32 512, 512
      %28 = vsyncadd [#allocation3], %s27
      %s29 = sshll.u32 [#allocation2], 4
      %s30 = int_to_ptr.vmem [resolvable:$true] %s29
      %35 = dma.hbm_to_vmem [thread:$0]  %s5, 512, %s30, [#allocation3], 128, 128, 8
    $region25: #{_lambda_.1} parent=1 // pred_fallthru
      _
    // Predicated region
    $region26: #{_lambda_.1} parent=1 // pred_check
      _
    $region27: #{_lambda_.1} parent=1 // pred_check_branch
      %37 = sbr.rel (0) target = $region29
    $region28: #{_lambda_.1} parent=1 // pred_region
      _
    $region29: #{_lambda_.1} parent=1 // pred_fallthru
      _
    // Predicated region
    $region30: #{_lambda_.1} parent=1 // pred_check
      _
    $region31: #{_lambda_.1} parent=1 // pred_check_branch
      %39 = sbr.rel (0) target = $region33
    $region32: #{_lambda_.1} parent=1 // pred_region
      _
    $region33: #{_lambda_.1} parent=1 // pred_fallthru
      _
    // Predicated region
    $region34: #{_lambda_.1} parent=1 // pred_check
      _
    $region35: #{_lambda_.1} parent=1 // pred_check_branch
      %41 = sbr.rel (0) target = $region37
    $region36: #{_lambda_.1} parent=1 // pred_region
      %42 = dma.done [#allocation3], 512
    $region37: #{_lambda_.1} parent=1 // pred_fallthru
      _
    %v43 = vld [vmem:[%s0] sm:$0xf]
    %v44 = vld [vmem:[%s1] sm:$0xf]
    %v45 = vld [vmem:[%s2] sm:$0x1]
    %v47 = vlaneseq
    %v48 = vshrl.u32 %v47, 7
    %v49 = vsub.s32 0, %v48
    %v50 = vrot.slane %v45, %v49
    %vm52 = vcmask 31744
    %v54 = vsel %vm52, %v43, 0
    %vm56 = vcmask 1043456
    %v58 = vsel %vm56, %v44, 0
    %60 = vmatprep.subr.mxu0 0.0
    %61 = vmatpush1.msra.mxu0 %v58
    %62 = vmatprep.subr.mxu0 0.0
    %63 = vmatpush1.msra.mxu0 0.0
    %64 = vmatprep.subr.mxu0 0.0
    %65 = vmatpush1.msra.mxu0 0.0
    %66 = vmatprep.subr.mxu0 0.0
    %67 = vmatpush1.msra.mxu0 0.0
    %68 = vmatprep.subr.mxu0 0.0
    %69 = vmatpush1.msra.mxu0 0.0
    %70 = vmatprep.subr.mxu0 0.0
    %71 = vmatpush1.msra.mxu0 0.0
    %72 = vmatprep.subr.mxu0 0.0
    %73 = vmatpush1.msra.mxu0 0.0
    %74 = vmatprep.subr.mxu0 0.0
    %75 = vmatpush1.msra.mxu0 0.0
    %76 = vmatprep.subr.mxu0 0.0
    %77 = vmatpush1.msra.mxu0 0.0
    %78 = vmatprep.subr.mxu0 0.0
    %79 = vmatpush1.msra.mxu0 0.0
    %80 = vmatprep.subr.mxu0 0.0
    %81 = vmatpush1.msra.mxu0 0.0
    %82 = vmatprep.subr.mxu0 0.0
    %83 = vmatpush1.msra.mxu0 0.0
    %84 = vmatprep.subr.mxu0 0.0
    %85 = vmatpush1.msra.mxu0 0.0
    %86 = vmatprep.subr.mxu0 0.0
    %87 = vmatpush1.msra.mxu0 0.0
    %88 = vmatprep.subr.mxu0 0.0
    %89 = vmatpush1.msra.mxu0 0.0
    %90 = vmatprep.subr.mxu0 0.0
    %91 = vmatpush1.msra.mxu0 0.0
    %92 = vmatprep.subr.mxu0 0.0
    %93 = vmatpush1.msra.mxu0 0.0
    %94 = vmatprep.subr.mxu0 0.0
    %95 = vmatpush1.msra.mxu0 0.0
    %96 = vmatprep.subr.mxu0 0.0
    %97 = vmatpush1.msra.mxu0 0.0
    %98 = vmatprep.subr.mxu0 0.0
    %99 = vmatpush1.msra.mxu0 0.0
    %100 = vmatprep.subr.mxu0 0.0
    %101 = vmatpush1.msra.mxu0 0.0
    %102 = vmatprep.subr.mxu0 0.0
    %103 = vmatpush1.msra.mxu0 0.0
    %104 = vmatprep.subr.mxu0 0.0
    %105 = vmatpush1.msra.mxu0 0.0
    %106 = vmatprep.subr.mxu0 0.0
    %107 = vmatpush1.msra.mxu0 0.0
    %108 = vmatprep.subr.mxu0 0.0
    %109 = vmatpush1.msra.mxu0 0.0
    %110 = vmatprep.subr.mxu0 0.0
    %111 = vmatpush1.msra.mxu0 0.0
    %112 = vmatprep.subr.mxu0 0.0
    %113 = vmatpush1.msra.mxu0 0.0
    %114 = vmatprep.subr.mxu0 0.0
    %115 = vmatpush1.msra.mxu0 0.0
    %116 = vmatprep.subr.mxu0 0.0
    %117 = vmatpush1.msra.mxu0 0.0
    %118 = vmatprep.subr.mxu0 0.0
    %119 = vmatpush1.msra.mxu0 0.0
    %120 = vmatprep.subr.mxu0 0.0
    %121 = vmatpush1.msra.mxu0 0.0
    %122 = vmatprep.subr.mxu0 0.0
    %123 = vmatpush1.msra.mxu0 0.0
    %124 = vmatprep.mubr.f32.mxu0 0.0
    %125 = vmatmul.mubr.f32.gmra.mrb[0].mxu0 %v54
    %v126 = vpop.f32.mrb[0].mxu0
    %v127 = vadd.f32 %v50, %v126
    %v128 = vpop.f32.mrb[0].mxu0
    %129 = vdwg.mxu0
    %vm130 = vcmp.ge.f32.partialorder %v127, 0.0
    %v131 = vmul.f32 %v127, 0.01
    %v132 = vsel %vm130, %v127, %v131
    %v133 = vld [vmem:[%s3] sm:$0xff]
    %v134 = vld [vmem:[%s3 + $0x8] sm:$0xff]
    %v135 = vld [vmem:[%s3 + $0x10] sm:$0xff]
    %v136 = vld [vmem:[%s3 + $0x18] sm:$0xff]
    %v137 = vld [vmem:[%s4] sm:$0x1]
    %v139 = vlaneseq
    %v140 = vshrl.u32 %v139, 7
    %v141 = vsub.s32 0, %v140
    %v142 = vrot.slane %v137, %v141
    %vm144 = vcmask 261120
    %v146 = vsel %vm144, %v132, 0
    %148 = vmatprep.subr.mxu0 0.0
    %149 = vmatpush1.msra.mxu0 %v133
    %150 = vmatprep.subr.mxu0 0.0
    %151 = vmatpush1.msra.mxu0 %v134
    %152 = vmatprep.subr.mxu0 0.0
    %153 = vmatpush1.msra.mxu0 %v135
    %154 = vmatprep.subr.mxu0 0.0
    %155 = vmatpush1.msra.mxu0 %v136
    %156 = vmatprep.subr.mxu0 0.0
    %157 = vmatpush1.msra.mxu0 0.0
    %158 = vmatprep.subr.mxu0 0.0
    %159 = vmatpush1.msra.mxu0 0.0
    %160 = vmatprep.subr.mxu0 0.0
    %161 = vmatpush1.msra.mxu0 0.0
    %162 = vmatprep.subr.mxu0 0.0
    %163 = vmatpush1.msra.mxu0 0.0
    %164 = vmatprep.subr.mxu0 0.0
    %165 = vmatpush1.msra.mxu0 0.0
    %166 = vmatprep.subr.mxu0 0.0
    %167 = vmatpush1.msra.mxu0 0.0
    %168 = vmatprep.subr.mxu0 0.0
    %169 = vmatpush1.msra.mxu0 0.0
    %170 = vmatprep.subr.mxu0 0.0
    %171 = vmatpush1.msra.mxu0 0.0
    %172 = vmatprep.subr.mxu0 0.0
    %173 = vmatpush1.msra.mxu0 0.0
    %174 = vmatprep.subr.mxu0 0.0
    %175 = vmatpush1.msra.mxu0 0.0
    %176 = vmatprep.subr.mxu0 0.0
    %177 = vmatpush1.msra.mxu0 0.0
    %178 = vmatprep.subr.mxu0 0.0
    %179 = vmatpush1.msra.mxu0 0.0
    %180 = vmatprep.subr.mxu0 0.0
    %181 = vmatpush1.msra.mxu0 0.0
    %182 = vmatprep.subr.mxu0 0.0
    %183 = vmatpush1.msra.mxu0 0.0
    %184 = vmatprep.subr.mxu0 0.0
    %185 = vmatpush1.msra.mxu0 0.0
    %186 = vmatprep.subr.mxu0 0.0
    %187 = vmatpush1.msra.mxu0 0.0
    %188 = vmatprep.subr.mxu0 0.0
    %189 = vmatpush1.msra.mxu0 0.0
    %190 = vmatprep.subr.mxu0 0.0
    %191 = vmatpush1.msra.mxu0 0.0
    %192 = vmatprep.subr.mxu0 0.0
    %193 = vmatpush1.msra.mxu0 0.0
    %194 = vmatprep.subr.mxu0 0.0
    %195 = vmatpush1.msra.mxu0 0.0
    %196 = vmatprep.subr.mxu0 0.0
    %197 = vmatpush1.msra.mxu0 0.0
    %198 = vmatprep.subr.mxu0 0.0
    %199 = vmatpush1.msra.mxu0 0.0
    %200 = vmatprep.subr.mxu0 0.0
    %201 = vmatpush1.msra.mxu0 0.0
    %202 = vmatprep.subr.mxu0 0.0
    %203 = vmatpush1.msra.mxu0 0.0
    %204 = vmatprep.subr.mxu0 0.0
    %205 = vmatpush1.msra.mxu0 0.0
    %206 = vmatprep.subr.mxu0 0.0
    %207 = vmatpush1.msra.mxu0 0.0
    %208 = vmatprep.subr.mxu0 0.0
    %209 = vmatpush1.msra.mxu0 0.0
    %210 = vmatprep.subr.mxu0 0.0
    %211 = vmatpush1.msra.mxu0 0.0
    %212 = vmatprep.mubr.f32.mxu0 0.0
    %213 = vmatmul.mubr.f32.gmra.mrb[0].mxu0 %v146
    %v214 = vpop.f32.mrb[0].mxu0
    %v215 = vadd.f32 %v142, %v214
    %v216 = vpop.f32.mrb[0].mxu0
    %217 = vdwg.mxu0
    %vm218 = vcmp.ge.f32.partialorder %v215, 0.0
    %v219 = vmul.f32 %v215, 0.01
    %v220 = vsel %vm218, %v215, %v219
    %v221 = vld [vmem:[#allocation2] sm:$0xff]
    %v222 = vld [vmem:[#allocation2 + $0x8] sm:$0xff]
    %v223 = vld [vmem:[#allocation2 + $0x10] sm:$0xff]
    %v224 = vld [vmem:[#allocation2 + $0x18] sm:$0xff]
    %v225 = vld [vmem:[%s6] sm:$0x1]
    %vm226 = vcmp.ge.f32.partialorder %v220, 0.0
    %v227 = vmul.f32 %v220, 0.01
    %v228 = vsel %vm226, %v220, %v227
    %v230 = vlaneseq
    %v231 = vshrl.u32 %v230, 7
    %v232 = vsub.s32 0, %v231
    %v233 = vrot.slane %v225, %v232
    %v236 = vsel %vm144, %v228, 0
    %238 = vmatprep.subr.mxu0 0.0
    %239 = vmatpush1.msra.mxu0 %v221
    %240 = vmatprep.subr.mxu0 0.0
    %241 = vmatpush1.msra.mxu0 %v222
    %242 = vmatprep.subr.mxu0 0.0
    %243 = vmatpush1.msra.mxu0 %v223
    %244 = vmatprep.subr.mxu0 0.0
    %245 = vmatpush1.msra.mxu0 %v224
    %246 = vmatprep.subr.mxu0 0.0
    %247 = vmatpush1.msra.mxu0 0.0
    %248 = vmatprep.subr.mxu0 0.0
    %249 = vmatpush1.msra.mxu0 0.0
    %250 = vmatprep.subr.mxu0 0.0
    %251 = vmatpush1.msra.mxu0 0.0
    %252 = vmatprep.subr.mxu0 0.0
    %253 = vmatpush1.msra.mxu0 0.0
    %254 = vmatprep.subr.mxu0 0.0
    %255 = vmatpush1.msra.mxu0 0.0
    %256 = vmatprep.subr.mxu0 0.0
    %257 = vmatpush1.msra.mxu0 0.0
    %258 = vmatprep.subr.mxu0 0.0
    %259 = vmatpush1.msra.mxu0 0.0
    %260 = vmatprep.subr.mxu0 0.0
    %261 = vmatpush1.msra.mxu0 0.0
    %262 = vmatprep.subr.mxu0 0.0
    %263 = vmatpush1.msra.mxu0 0.0
    %264 = vmatprep.subr.mxu0 0.0
    %265 = vmatpush1.msra.mxu0 0.0
    %266 = vmatprep.subr.mxu0 0.0
    %267 = vmatpush1.msra.mxu0 0.0
    %268 = vmatprep.subr.mxu0 0.0
    %269 = vmatpush1.msra.mxu0 0.0
    %270 = vmatprep.subr.mxu0 0.0
    %271 = vmatpush1.msra.mxu0 0.0
    %272 = vmatprep.subr.mxu0 0.0
    %273 = vmatpush1.msra.mxu0 0.0
    %274 = vmatprep.subr.mxu0 0.0
    %275 = vmatpush1.msra.mxu0 0.0
    %276 = vmatprep.subr.mxu0 0.0
    %277 = vmatpush1.msra.mxu0 0.0
    %278 = vmatprep.subr.mxu0 0.0
    %279 = vmatpush1.msra.mxu0 0.0
    %280 = vmatprep.subr.mxu0 0.0
    %281 = vmatpush1.msra.mxu0 0.0
    %282 = vmatprep.subr.mxu0 0.0
    %283 = vmatpush1.msra.mxu0 0.0
    %284 = vmatprep.subr.mxu0 0.0
    %285 = vmatpush1.msra.mxu0 0.0
    %286 = vmatprep.subr.mxu0 0.0
    %287 = vmatpush1.msra.mxu0 0.0
    %288 = vmatprep.subr.mxu0 0.0
    %289 = vmatpush1.msra.mxu0 0.0
    %290 = vmatprep.subr.mxu0 0.0
    %291 = vmatpush1.msra.mxu0 0.0
    %292 = vmatprep.subr.mxu0 0.0
    %293 = vmatpush1.msra.mxu0 0.0
    %294 = vmatprep.subr.mxu0 0.0
    %295 = vmatpush1.msra.mxu0 0.0
    %296 = vmatprep.subr.mxu0 0.0
    %297 = vmatpush1.msra.mxu0 0.0
    %298 = vmatprep.subr.mxu0 0.0
    %299 = vmatpush1.msra.mxu0 0.0
    %300 = vmatprep.subr.mxu0 0.0
    %301 = vmatpush1.msra.mxu0 0.0
    %302 = vmatprep.mubr.f32.mxu0 0.0
    %303 = vmatmul.mubr.f32.gmra.mrb[0].mxu0 %v236
    %v304 = vpop.f32.mrb[0].mxu0
    %v305 = vadd.f32 %v233, %v304
    %v306 = vpop.f32.mrb[0].mxu0
    %307 = vdwg.mxu0
    %vm308 = vcmp.ge.f32.partialorder %v305, 0.0
    %v309 = vmul.f32 %v305, 0.01
    %v310 = vsel %vm308, %v305, %v309
    %v311 = vld [vmem:[%s7] sm:$0x1]
    %v312 = vmul.f32 %v311, %v311
    %v313 = vand.u32 2147483647, %v310
    %v314 = vmul.f32 %v313, %v313
    %316 = vset.pattern.permute.xlu0 0
    %317 = vperm.xlu0 %316, %v314
    %v318 = vpop.permute.xlu0 %317
    %v321 = vlaneseq
    %v322 = vshrl.u32 %v321, 7
    %v323 = vsub.s32 0, %v322
    %v324 = vrot.slane %v312, %v323
    %v326 = vsub.f32 %v318, %v324
    %v327 = vmul.f32 %v326, %v326
    %328 = vset.pattern.permute.xlu0 8
    %329 = vperm.xlu0 %328, %v314
    %v330 = vpop.permute.xlu0 %329
    %v332 = vmul.f32 %v324, %v330
    %v333 = vadd.f32 %v327, %v332
    %v334 = vrcp.pop %v333
    %335 = vset.pattern.permute.xlu0 4
    %336 = vperm.xlu0 %335, %v314
    %v337 = vpop.permute.xlu0 %336
    %v339 = vmul.f32 %v337, %v326
    %v340 = vmul.f32 %v339, %v334
    %v341 = vadd.f32 %v340, 0.0
    %v343 = vlaneseq
    %v344 = vshrl.u32 %v343, 7
    %v345 = vsub.s32 0, %v344
    %v346 = vrot.slane %v311, %v345
    %349 = vset.pattern.permute.xlu0 8
    %350 = vperm.xlu0 %349, %v313
    %v351 = vpop.permute.xlu0 %350
    %v353 = vmul.f32 %v346, %v351
    %v354 = vmul.f32 %v337, %v353
    %v355 = vmul.f32 %v354, %v334
    %v356 = vadd.f32 %v355, 0.0
    %357 = vset.pattern.permute.xlu0 1
    %358 = vperm.xlu0 %357, %v314
    %v359 = vpop.permute.xlu0 %358
    %v361 = vsub.f32 %v359, %v324
    %v362 = vmul.f32 %v361, %v361
    %363 = vset.pattern.permute.xlu0 9
    %364 = vperm.xlu0 %363, %v314
    %v365 = vpop.permute.xlu0 %364
    %v367 = vmul.f32 %v324, %v365
    %v368 = vadd.f32 %v362, %v367
    %v369 = vrcp.pop %v368
    %370 = vset.pattern.permute.xlu0 5
    %371 = vperm.xlu0 %370, %v314
    %v372 = vpop.permute.xlu0 %371
    %v374 = vmul.f32 %v372, %v361
    %v375 = vmul.f32 %v374, %v369
    %v376 = vadd.f32 %v341, %v375
    %377 = vset.pattern.permute.xlu0 9
    %378 = vperm.xlu0 %377, %v313
    %v379 = vpop.permute.xlu0 %378
    %v381 = vmul.f32 %v346, %v379
    %v382 = vmul.f32 %v372, %v381
    %v383 = vmul.f32 %v382, %v369
    %v384 = vadd.f32 %v356, %v383
    %385 = vset.pattern.permute.xlu0 2
    %386 = vperm.xlu0 %385, %v314
    %v387 = vpop.permute.xlu0 %386
    %v389 = vsub.f32 %v387, %v324
    %v390 = vmul.f32 %v389, %v389
    %391 = vset.pattern.permute.xlu0 10
    %392 = vperm.xlu0 %391, %v314
    %v393 = vpop.permute.xlu0 %392
    %v395 = vmul.f32 %v324, %v393
    %v396 = vadd.f32 %v390, %v395
    %v397 = vrcp.pop %v396
    %398 = vset.pattern.permute.xlu0 6
    %399 = vperm.xlu0 %398, %v314
    %v400 = vpop.permute.xlu0 %399
    %v402 = vmul.f32 %v400, %v389
    %v403 = vmul.f32 %v402, %v397
    %v404 = vadd.f32 %v376, %v403
    %405 = vset.pattern.permute.xlu0 10
    %406 = vperm.xlu0 %405, %v313
    %v407 = vpop.permute.xlu0 %406
    %v409 = vmul.f32 %v346, %v407
    %v410 = vmul.f32 %v400, %v409
    %v411 = vmul.f32 %v410, %v397
    %v412 = vadd.f32 %v384, %v411
    %413 = vset.pattern.permute.xlu0 3
    %414 = vperm.xlu0 %413, %v314
    %v415 = vpop.permute.xlu0 %414
    %v417 = vsub.f32 %v415, %v324
    %v418 = vmul.f32 %v417, %v417
    %419 = vset.pattern.permute.xlu0 11
    %420 = vperm.xlu0 %419, %v314
    %v421 = vpop.permute.xlu0 %420
    %v423 = vmul.f32 %v324, %v421
    %v424 = vadd.f32 %v418, %v423
    %v425 = vrcp.pop %v424
    %426 = vset.pattern.permute.xlu0 7
    %427 = vperm.xlu0 %426, %v314
    %v428 = vpop.permute.xlu0 %427
    %v430 = vmul.f32 %v428, %v417
    %v431 = vmul.f32 %v430, %v425
    %v432 = vadd.f32 %v404, %v431
    %433 = vset.pattern.permute.xlu0 11
    %434 = vperm.xlu0 %433, %v313
    %v435 = vpop.permute.xlu0 %434
    %v437 = vmul.f32 %v346, %v435
    %v438 = vmul.f32 %v428, %v437
    %v439 = vmul.f32 %v438, %v425
    %v440 = vadd.f32 %v412, %v439
    %441 = vset.pattern.permute.xlu0 12
    %442 = vperm.xlu0 %441, %v314
    %v443 = vpop.permute.xlu0 %442
    %v445 = vsub.f32 %v443, %v324
    %v446 = vmul.f32 %v445, %v445
    %447 = vset.pattern.permute.xlu0 20
    %448 = vperm.xlu0 %447, %v314
    %v449 = vpop.permute.xlu0 %448
    %v451 = vmul.f32 %v324, %v449
    %v452 = vadd.f32 %v446, %v451
    %v453 = vrcp.pop %v452
    %454 = vset.pattern.permute.xlu0 16
    %455 = vperm.xlu0 %454, %v314
    %v456 = vpop.permute.xlu0 %455
    %v458 = vmul.f32 %v456, %v445
    %v459 = vmul.f32 %v458, %v453
    %v460 = vadd.f32 %v459, 0.0
    %461 = vset.pattern.permute.xlu0 20
    %462 = vperm.xlu0 %461, %v313
    %v463 = vpop.permute.xlu0 %462
    %v465 = vmul.f32 %v346, %v463
    %v466 = vmul.f32 %v456, %v465
    %v467 = vmul.f32 %v466, %v453
    %v468 = vadd.f32 %v467, 0.0
    %469 = vset.pattern.permute.xlu0 13
    %470 = vperm.xlu0 %469, %v314
    %v471 = vpop.permute.xlu0 %470
    %v473 = vsub.f32 %v471, %v324
    %v474 = vmul.f32 %v473, %v473
    %475 = vset.pattern.permute.xlu0 21
    %476 = vperm.xlu0 %475, %v314
    %v477 = vpop.permute.xlu0 %476
    %v479 = vmul.f32 %v324, %v477
    %v480 = vadd.f32 %v474, %v479
    %v481 = vrcp.pop %v480
    %482 = vset.pattern.permute.xlu0 17
    %483 = vperm.xlu0 %482, %v314
    %v484 = vpop.permute.xlu0 %483
    %v486 = vmul.f32 %v484, %v473
    %v487 = vmul.f32 %v486, %v481
    %v488 = vadd.f32 %v460, %v487
    %489 = vset.pattern.permute.xlu0 21
    %490 = vperm.xlu0 %489, %v313
    %v491 = vpop.permute.xlu0 %490
    %v493 = vmul.f32 %v346, %v491
    %v494 = vmul.f32 %v484, %v493
    %v495 = vmul.f32 %v494, %v481
    %v496 = vadd.f32 %v468, %v495
    %497 = vset.pattern.permute.xlu0 14
    %498 = vperm.xlu0 %497, %v314
    %v499 = vpop.permute.xlu0 %498
    %v501 = vsub.f32 %v499, %v324
    %v502 = vmul.f32 %v501, %v501
    %503 = vset.pattern.permute.xlu0 22
    %504 = vperm.xlu0 %503, %v314
    %v505 = vpop.permute.xlu0 %504
    %v507 = vmul.f32 %v324, %v505
    %v508 = vadd.f32 %v502, %v507
    %v509 = vrcp.pop %v508
    %510 = vset.pattern.permute.xlu0 18
    %511 = vperm.xlu0 %510, %v314
    %v512 = vpop.permute.xlu0 %511
    %v514 = vmul.f32 %v512, %v501
    %v515 = vmul.f32 %v514, %v509
    %v516 = vadd.f32 %v488, %v515
    %517 = vset.pattern.permute.xlu0 22
    %518 = vperm.xlu0 %517, %v313
    %v519 = vpop.permute.xlu0 %518
    %v521 = vmul.f32 %v346, %v519
    %v522 = vmul.f32 %v512, %v521
    %v523 = vmul.f32 %v522, %v509
    %v524 = vadd.f32 %v496, %v523
    %525 = vset.pattern.permute.xlu0 15
    %526 = vperm.xlu0 %525, %v314
    %v527 = vpop.permute.xlu0 %526
    %v529 = vsub.f32 %v527, %v324
    %v530 = vmul.f32 %v529, %v529
    %531 = vset.pattern.permute.xlu0 23
    %532 = vperm.xlu0 %531, %v314
    %v533 = vpop.permute.xlu0 %532
    %v535 = vmul.f32 %v324, %v533
    %v536 = vadd.f32 %v530, %v535
    %v537 = vrcp.pop %v536
    %538 = vset.pattern.permute.xlu0 19
    %539 = vperm.xlu0 %538, %v314
    %v540 = vpop.permute.xlu0 %539
    %v542 = vmul.f32 %v540, %v529
    %v543 = vmul.f32 %v542, %v537
    %v544 = vadd.f32 %v516, %v543
    %545 = vset.pattern.permute.xlu0 23
    %546 = vperm.xlu0 %545, %v313
    %v547 = vpop.permute.xlu0 %546
    %v549 = vmul.f32 %v346, %v547
    %v550 = vmul.f32 %v540, %v549
    %v551 = vmul.f32 %v550, %v537
    %v552 = vadd.f32 %v524, %v551
    %v553 = vadd.f32 %v432, 1.0
    %554 = vset.pattern.permute.xlu0 24
    %555 = vperm.xlu0 %554, %v313
    %v556 = vpop.permute.xlu0 %555
    %v558 = vadd.f32 %v553, %v556
    %v559 = vadd.f32 %v544, 1.0
    %560 = vset.pattern.permute.xlu0 25
    %561 = vperm.xlu0 %560, %v313
    %v562 = vpop.permute.xlu0 %561
    %v564 = vadd.f32 %v559, %v562
    %565 = vst [vmem:[%s8] sm:$0xf] %v558
    %566 = vst [vmem:[%s8 + $0x4] sm:$0xf] %v440
    %567 = vst [vmem:[%s8 + $0x8] sm:$0xf] %v564
    %568 = vst [vmem:[%s8 + $0xc] sm:$0xf] %v552
    // Predicated region
    $region38: #{_lambda_.1} parent=1 // pred_check
      _
    $region39: #{_lambda_.1} parent=1 // pred_check_branch
      %570 = sbr.rel (0) target = $region41
    $region40: #{_lambda_.1} parent=1 // pred_region
      _
    $region41: #{_lambda_.1} parent=1 // pred_fallthru
      _
    // Predicated region
    $region42: #{_lambda_.1} parent=1 // pred_check
      _
    $region43: #{_lambda_.1} parent=1 // pred_check_branch
      %572 = sbr.rel (0) target = $region45
    $region44: #{_lambda_.1} parent=1 // pred_region
      _
    $region45: #{_lambda_.1} parent=1 // pred_fallthru
      _
    %573 = vsyncpa [#allocation3], 1

</llo_original>
